<compile_context>
chip_gen: v5e
topology: v5e:2x2
jax: 0.10.0
libtpu: 0.0.40
codegen_flags: <defaults>
</compile_context>

<pallas_src>
import functools

import jax
import jax.numpy as jnp
from jax.experimental import pallas as pl
from jax.experimental.pallas import tpu as pltpu

K = 3              # deconv kernel size
PAD = 1            # deconv padding
CIN = 64           # fixed by the module
OUT_CHANNELS = 3
OCP = 8            # output channels padded to one sublane group
TB_MAX = 16        # max images per grid step (VMEM-bounded, see header)
LANE = 128


# ------------------------------ Pallas kernel -------------------------------

def _deconv_kernel(x_ref, w_ref, b_ref, o_ref, patch_ref, *, wp):
    # x_ref:     (CIN, Mt)        lane-flattened channel-major input tile
    # w_ref:     (OCP, K*K*CIN)   packed (flipped + transposed) weights
    # b_ref:     (OCP, 1)         padded bias
    # o_ref:     (OCP, Mt)        compact channel-major output tile
    # patch_ref: (K*K*CIN, Mt)    im2col^T scratch (built once per tile)
    C, Mt = x_ref.shape

    # Build im2col^T: each tap is a pure lane-shifted copy of the input tile
    # (no reshapes / relayouts).  Columns whose shifted read would fall outside
    # the tile are left unwritten -- they only ever feed "padding" output
    # positions that the wrapper slices away.
    for kh in range(K):
        for kw in range(K):
            t = kh * K + kw
            off = (kh - PAD) * wp + (kw - PAD)
            r0 = t * C
            if off >= 0:
                patch_ref[r0:r0 + C, 0:Mt - off] = x_ref[:, off:Mt]
            else:
                patch_ref[r0:r0 + C, -off:Mt] = x_ref[:, 0:Mt + off]

    # One fused MXU matmul over the whole K*K*CIN = 576 contraction; the bias
    # is added once to the small compact result.
    acc = jnp.dot(w_ref[...], patch_ref[...], preferred_element_type=jnp.float32)
    o_ref[...] = (acc + b_ref[...]).astype(o_ref.dtype)


# -------------------------------- wrapper ------------------------------------

def _round_up(a, b):
    return ((a + b - 1) // b) * b


def _choose_tb(batch):
    if batch <= 1:
        return 1
    # >=2 grid steps whenever there is more than one image (v7x megacore),
    # capped so the per-step VMEM footprint stays small on every generation.
    return min(TB_MAX, (batch + 1) // 2)


def conv_transpose_3x3_p1(x_nchw, w_packed, b_packed):
    """ConvTranspose2d(64, 3, kernel_size=3, stride=1, padding=1), PyTorch semantics."""
    B, C, H, W = x_nchw.shape
    Hp, Wp = H + 2 * PAD, W + 2 * PAD
    SEG = _round_up(Hp * Wp, LANE)            # 128-aligned per-image lane segment
    TB = _choose_tb(B)
    Bp = _round_up(B, TB)
    grid = (Bp // TB,)
    Mt = TB * SEG

    # ---- prologue: one small fused XLA pass -> channel-major, spatially
    #      zero-padded, lane-flattened, 128-aligned per-image segments.
    x_t = jnp.transpose(x_nchw, (1, 0, 2, 3))                           # (C, B, H, W)
    x_t = jnp.pad(x_t, ((0, 0), (0, Bp - B), (PAD, PAD), (PAD, PAD)))   # (C, Bp, Hp, Wp)
    x_t = x_t.reshape(C, Bp, Hp * Wp)
    x_t = jnp.pad(x_t, ((0, 0), (0, 0), (0, SEG - Hp * Wp)))
    x_flat = x_t.reshape(C, Bp * SEG)

    kernel = functools.partial(_deconv_kernel, wp=Wp)
    out = pl.pallas_call(
        kernel,
        out_shape=jax.ShapeDtypeStruct((OCP, Bp * SEG), jnp.float32),
        grid_spec=pltpu.PrefetchScalarGridSpec(
            num_scalar_prefetch=0,
            grid=grid,
            in_specs=[
                pl.BlockSpec((C, Mt), lambda i: (0, i)),
                pl.BlockSpec((OCP, K * K * C), lambda i: (0, 0)),
                pl.BlockSpec((OCP, 1), lambda i: (0, 0)),
            ],
            out_specs=pl.BlockSpec((OCP, Mt), lambda i: (0, i)),
            scratch_shapes=[pltpu.VMEM((K * K * C, Mt), jnp.float32)],
        ),
        compiler_params=pltpu.CompilerParams(
            dimension_semantics=("parallel",),
            vmem_limit_bytes=32 * 1024 * 1024,
        ),
    )(x_flat, w_packed, b_packed)

    # ---- epilogue: tiny reshape/slice/transpose on the real (B,3,H,W) payload.
    y = out.reshape(OCP, Bp, SEG)[:OUT_CHANNELS, :B, :Hp * Wp]
    y = y.reshape(OUT_CHANNELS, B, Hp, Wp)[:, :, PAD:PAD + H, PAD:PAD + W]
    return jnp.transpose(y, (1, 0, 2, 3))


# ------------------------------ parameters -----------------------------------

def init_params(key, n_channels):
    # NChannels is unused by the layer itself (matches the PyTorch module:
    # its only layer is ConvTranspose2d(64, 3, kernel_size=3, padding=1)).
    del n_channels
    k_w, k_b = jax.random.split(key)
    fan_in = OUT_CHANNELS * K * K
    bound = 1.0 / (fan_in ** 0.5)
    w = jax.random.uniform(k_w, (CIN, OUT_CHANNELS, K, K), jnp.float32, -bound, bound)
    b = jax.random.uniform(k_b, (OUT_CHANNELS,), jnp.float32, -bound, bound)
    return {"deconv11_w": w, "deconv11_b": b}


def pack_params(params):
    """One-time packing (outside the jitted forward): spatial flip, swap
    in/out channels, order the contraction as (kh, kw, cin) to match the
    im2col^T rows, pad Cout 3 -> 8 sublanes."""
    w, b = params["deconv11_w"], params["deconv11_b"]
    cin, cout = w.shape[0], w.shape[1]
    # equivalent "same"-conv weight, laid out (cout, kh, kw, cin)
    w_conv = jnp.flip(w, axis=(2, 3)).transpose(1, 2, 3, 0)
    w_mat = w_conv.reshape(cout, K * K * cin)
    w_mat = jnp.pad(w_mat, ((0, OCP - cout), (0, 0)))
    b_pad = jnp.pad(b, (0, OCP - cout)).reshape(OCP, 1)
    return w_mat, b_pad


@jax.jit
def decoder_forward(w_packed, b_packed, x):
    return conv_transpose_3x3_p1(x, w_packed, b_packed)


# ------------------------ pure-JAX reference (check) --------------------------

def ref_conv_transpose(x, w, b, padding=PAD):
    """Direct scatter-accumulate definition of ConvTranspose2d (stride=1)."""
    B, Cin, H, W = x.shape
    _, Cout, Kh, Kw = w.shape
    full = jnp.zeros((B, Cout, H + Kh - 1, W + Kw - 1), jnp.float32)
    for kh in range(Kh):
        for kw in range(Kw):
            contrib = jnp.einsum("bchw,cd->bdhw", x, w[:, :, kh, kw])
            full = full.at[:, :, kh:kh + H, kw:kw + W].add(contrib)
    out = full[:, :, padding:padding + H, padding:padding + W]
    return out + b.reshape(1, Cout, 1, 1)


# ---------------------------------- main --------------------------------------

if __name__ == "__main__":
    key = jax.random.PRNGKey(0)
    k_param, k_x = jax.random.split(key)

    B, H, W = 2, 8, 8                     # in_channels fixed at 64 by the module
    x = jax.random.normal(k_x, (B, CIN, H, W), jnp.float32)

    params = init_params(k_param, CIN)
    w_packed, b_packed = pack_params(params)

    out = decoder_forward(w_packed, b_packed, x)
    out = jax.block_until_ready(out)
    assert out.shape == (B, OUT_CHANNELS, H, W), out.shape

    ref = ref_conv_transpose(x, params["deconv11_w"], params["deconv11_b"])
    assert jnp.allclose(out, ref, rtol=1e-3, atol=1e-3), float(
        jnp.max(jnp.abs(out - ref)))

    print("KERNEL_OK")
</pallas_src>

<mosaic_0001>
module attributes {stable_mosaic.version = 11 : i64} {
  func.func @_deconv_kernel(%arg0: i32, %arg1: memref<64x128xf32, #tpu.memory_space<vmem>>, %arg2: memref<8x576xf32, #tpu.memory_space<vmem>>, %arg3: memref<8x1xf32, #tpu.memory_space<vmem>>, %arg4: memref<8x128xf32, #tpu.memory_space<vmem>>, %arg5: memref<576x128xf32, #tpu.memory_space<vmem>>) attributes {dimension_semantics = [#tpu.dimension_semantics<parallel>], iteration_bounds = array<i64: 2>, scalar_prefetch = 0 : i64, scratch_operands = 1 : i64, tpu.core_type = #tpu.core_type<tc>, window_params = [{transform_indices = @transform_0, window_bounds = array<i64: 64, 128>}, {pipeline_mode = #tpu.pipeline_mode<synchronous>, transform_indices = @transform_1, window_bounds = array<i64: 8, 576>}, {pipeline_mode = #tpu.pipeline_mode<synchronous>, transform_indices = @transform_2, window_bounds = array<i64: 8, 1>}, {transform_indices = @transform_3, window_bounds = array<i64: 8, 128>}]} {
    %c0 = arith.constant 0 : index
    %c0_0 = arith.constant 0 : index
    %0 = vector.load %arg1[%c0, %c0_0] : memref<64x128xf32, #tpu.memory_space<vmem>>, vector<64x117xf32>
    %c0_1 = arith.constant 0 : index
    %c11 = arith.constant 11 : index
    %1 = vector.load %arg5[%c0_1, %c11] : memref<576x128xf32, #tpu.memory_space<vmem>>, vector<64x117xf32>
    tpu.vector_store %arg5[%c0_1, %c11], %0 {strides = array<i32>} : memref<576x128xf32, #tpu.memory_space<vmem>>, vector<64x117xf32>,
    %c0_2 = arith.constant 0 : index
    %c0_3 = arith.constant 0 : index
    %2 = vector.load %arg1[%c0_2, %c0_3] : memref<64x128xf32, #tpu.memory_space<vmem>>, vector<64x118xf32>
    %c64 = arith.constant 64 : index
    %c10 = arith.constant 10 : index
    %3 = vector.load %arg5[%c64, %c10] : memref<576x128xf32, #tpu.memory_space<vmem>>, vector<64x118xf32>
    tpu.vector_store %arg5[%c64, %c10], %2 {strides = array<i32>} : memref<576x128xf32, #tpu.memory_space<vmem>>, vector<64x118xf32>,
    %c0_4 = arith.constant 0 : index
    %c0_5 = arith.constant 0 : index
    %4 = vector.load %arg1[%c0_4, %c0_5] : memref<64x128xf32, #tpu.memory_space<vmem>>, vector<64x119xf32>
    %c128 = arith.constant 128 : index
    %c9 = arith.constant 9 : index
    %5 = vector.load %arg5[%c128, %c9] : memref<576x128xf32, #tpu.memory_space<vmem>>, vector<64x119xf32>
    tpu.vector_store %arg5[%c128, %c9], %4 {strides = array<i32>} : memref<576x128xf32, #tpu.memory_space<vmem>>, vector<64x119xf32>,
    %c0_6 = arith.constant 0 : index
    %c0_7 = arith.constant 0 : index
    %6 = vector.load %arg1[%c0_6, %c0_7] : memref<64x128xf32, #tpu.memory_space<vmem>>, vector<64x127xf32>
    %c192 = arith.constant 192 : index
    %c1 = arith.constant 1 : index
    %7 = vector.load %arg5[%c192, %c1] : memref<576x128xf32, #tpu.memory_space<vmem>>, vector<64x127xf32>
    tpu.vector_store %arg5[%c192, %c1], %6 {strides = array<i32>} : memref<576x128xf32, #tpu.memory_space<vmem>>, vector<64x127xf32>,
    %c0_8 = arith.constant 0 : index
    %c0_9 = arith.constant 0 : index
    %8 = vector.load %arg1[%c0_8, %c0_9] : memref<64x128xf32, #tpu.memory_space<vmem>>, vector<64x128xf32>
    %c256 = arith.constant 256 : index
    %c0_10 = arith.constant 0 : index
    %9 = vector.load %arg5[%c256, %c0_10] : memref<576x128xf32, #tpu.memory_space<vmem>>, vector<64x128xf32>
    tpu.vector_store %arg5[%c256, %c0_10], %8 {strides = array<i32>} : memref<576x128xf32, #tpu.memory_space<vmem>>, vector<64x128xf32>,
    %c0_11 = arith.constant 0 : index
    %c1_12 = arith.constant 1 : index
    %10 = vector.load %arg1[%c0_11, %c1_12] : memref<64x128xf32, #tpu.memory_space<vmem>>, vector<64x127xf32>
    %c320 = arith.constant 320 : index
    %c0_13 = arith.constant 0 : index
    %11 = vector.load %arg5[%c320, %c0_13] : memref<576x128xf32, #tpu.memory_space<vmem>>, vector<64x127xf32>
    tpu.vector_store %arg5[%c320, %c0_13], %10 {strides = array<i32>} : memref<576x128xf32, #tpu.memory_space<vmem>>, vector<64x127xf32>,
    %c0_14 = arith.constant 0 : index
    %c9_15 = arith.constant 9 : index
    %12 = vector.load %arg1[%c0_14, %c9_15] : memref<64x128xf32, #tpu.memory_space<vmem>>, vector<64x119xf32>
    %c384 = arith.constant 384 : index
    %c0_16 = arith.constant 0 : index
    %13 = vector.load %arg5[%c384, %c0_16] : memref<576x128xf32, #tpu.memory_space<vmem>>, vector<64x119xf32>
    tpu.vector_store %arg5[%c384, %c0_16], %12 {strides = array<i32>} : memref<576x128xf32, #tpu.memory_space<vmem>>, vector<64x119xf32>,
    %c0_17 = arith.constant 0 : index
    %c10_18 = arith.constant 10 : index
    %14 = vector.load %arg1[%c0_17, %c10_18] : memref<64x128xf32, #tpu.memory_space<vmem>>, vector<64x118xf32>
    %c448 = arith.constant 448 : index
    %c0_19 = arith.constant 0 : index
    %15 = vector.load %arg5[%c448, %c0_19] : memref<576x128xf32, #tpu.memory_space<vmem>>, vector<64x118xf32>
    tpu.vector_store %arg5[%c448, %c0_19], %14 {strides = array<i32>} : memref<576x128xf32, #tpu.memory_space<vmem>>, vector<64x118xf32>,
    %c0_20 = arith.constant 0 : index
    %c11_21 = arith.constant 11 : index
    %16 = vector.load %arg1[%c0_20, %c11_21] : memref<64x128xf32, #tpu.memory_space<vmem>>, vector<64x117xf32>
    %c512 = arith.constant 512 : index
    %c0_22 = arith.constant 0 : index
    %17 = vector.load %arg5[%c512, %c0_22] : memref<576x128xf32, #tpu.memory_space<vmem>>, vector<64x117xf32>
    tpu.vector_store %arg5[%c512, %c0_22], %16 {strides = array<i32>} : memref<576x128xf32, #tpu.memory_space<vmem>>, vector<64x117xf32>,
    %c0_23 = arith.constant 0 : index
    %c0_24 = arith.constant 0 : index
    %18 = vector.load %arg2[%c0_23, %c0_24] : memref<8x576xf32, #tpu.memory_space<vmem>>, vector<8x576xf32>
    %c0_25 = arith.constant 0 : index
    %c0_26 = arith.constant 0 : index
    %19 = vector.load %arg5[%c0_25, %c0_26] : memref<576x128xf32, #tpu.memory_space<vmem>>, vector<576x128xf32>
    %cst = arith.constant dense<0.000000e+00> : vector<8x128xf32>
    %20 = tpu.matmul %18, %19, %cst {dimension_numbers = #tpu.dot_dimension_numbers<[1], [0], [0], [1], [0, 0, 1, 1], [], []>} : vector<8x576xf32>, vector<576x128xf32>, vector<8x128xf32> -> vector<8x128xf32>
    %c0_27 = arith.constant 0 : index
    %c0_28 = arith.constant 0 : index
    %21 = vector.load %arg3[%c0_27, %c0_28] : memref<8x1xf32, #tpu.memory_space<vmem>>, vector<8x1xf32>
    %22 = vector.broadcast %21 : vector<8x1xf32> to vector<8x128xf32>
    %23 = arith.addf %20, %22 : vector<8x128xf32>
    %c0_29 = arith.constant 0 : index
    %c0_30 = arith.constant 0 : index
    %24 = vector.load %arg4[%c0_29, %c0_30] : memref<8x128xf32, #tpu.memory_space<vmem>>, vector<8x128xf32>
    tpu.vector_store %arg4[%c0_29, %c0_30], %23 {strides = array<i32>} : memref<8x128xf32, #tpu.memory_space<vmem>>, vector<8x128xf32>,
    return
  }
  func.func @transform_0(%arg0: i32) -> (i32, i32) {
    %c0_i32 = arith.constant 0 : i32
    %c0_i32_0 = arith.constant 0 : i32
    return %c0_i32, %arg0 : i32, i32
  }
  func.func @transform_1(%arg0: i32) -> (i32, i32) {
    %c0_i32 = arith.constant 0 : i32
    %c0_i32_0 = arith.constant 0 : i32
    %c0_i32_1 = arith.constant 0 : i32
    return %c0_i32, %c0_i32_0 : i32, i32
  }
  func.func @transform_2(%arg0: i32) -> (i32, i32) {
    %c0_i32 = arith.constant 0 : i32
    %c0_i32_0 = arith.constant 0 : i32
    %c0_i32_1 = arith.constant 0 : i32
    return %c0_i32, %c0_i32_0 : i32, i32
  }
  func.func @transform_3(%arg0: i32) -> (i32, i32) {
    %c0_i32 = arith.constant 0 : i32
    %c0_i32_0 = arith.constant 0 : i32
    return %c0_i32, %arg0 : i32, i32
  }
}

</mosaic_0001>

<llo_original>
// kernel: decoder_forward.1
$region0: #{decoder_forward.1}
  #allocation0 [shape = 'u32[]', space=smem, size = 0x4, offset = 0x4, fixed_abs, tag = 'smem constant byte address 0x4 - core index']
  #allocation1 [shape = 'u32[72,128]{1,0:T(1,128)}', space=vmem, size = 0x9000, scoped, tag = 'internal scratch']
  #allocation2 [shape = 'f32[576,128]{1,0:T(8,128)}', space=vmem, size = 0x48000, scoped, tag = 'scratch operand']
  %s0 = inlined_call_operand.vmem [shape: f32[64,256], index: 0, kind: input, shape index: {}]
  %s1 = inlined_call_operand.vmem [shape: f32[8,576], index: 1, kind: input, shape index: {}]
  %s2 = inlined_call_operand.vmem [shape: f32[8,1], index: 2, kind: input, shape index: {}]
  %s3 = inlined_call_operand.vmem [shape: f32[8,256], index: 3, kind: output, shape index: {}]
  %s4 = sld [smem:[#allocation0]]
  $region83: #{decoder_forward.1} parent=0
    _
  %s6 = ssub.s32 1, %s4
  %s7 = scalar_select 0, %s6, %s4
  $region1: #{decoder_forward.1} parent=0
    #allocation3 [shape = 'u8[65536]{0}', space=vmem, size = 0x10000, scoped, tag = 'input window, operand 0']
    loop: start=0, step=1, limit=4
    $region2: #{decoder_forward.1} parent=1 // loop_pre_header
      _
    $region3: #{decoder_forward.1} parent=1 // loop_header
      %s9 = sphi 0, %s13
      %p10 = scmp.ge.s32.totalorder %s9, 4
      %s19 = sphi 0, %s21
      %s22 = sphi 0, %s19
      %s23 = sphi 0, %s22
      %s39 = sphi 0, %s23
      %s43 = sphi 0, %s43
      %s45 = sphi 0, %s43
      %s46 = sphi 0, %s45
      %s60 = sphi 0, %s46
      %s64 = sphi 0, %s64
      %s66 = sphi 0, %s64
      %s67 = sphi 0, %s66
      %s81 = sphi 0, %s67
      %s87 = sphi 0, %s89
      %s90 = sphi 0, %s87
      %s91 = sphi 0, %s90
      %s107 = sphi 0, %s91
    $region4: #{decoder_forward.1} parent=1 // loop_header_branch
      %12 = sbr.rel (%p10) target = $region8
    $region5: #{decoder_forward.1} parent=1 // loop_body
      %s14 = ssub.s32 %s9, 1
      %s15 = ssub.s32 %s9, 2
      %s16 = sadd.s32 %s9, 1
      %s17 = ssub.s32 %s9, %s16
      %p18 = scmp.eq.s32.totalorder %s17, 0
      %s20 = sadd.s32 %s19, 1
      %s21 = scalar_select %p18, %s19, %s20
      %p24 = pneg %p18
      %p25 = scmp.eq.s32.totalorder %s9, 1
      %p26 = por %p24, %p25
      %p27 = scmp.ne.s32.totalorder %s19, %s22
      %p28 = scmp.eq.s32.totalorder %s9, 0
      %p29 = por %p27, %p28
      %p30 = scmp.ne.s32.totalorder %s19, %s22
      %p31 = scmp.eq.s32.totalorder %s14, 1
      %p32 = por %p30, %p31
      %p33 = scmp.ne.s32.totalorder %s22, %s23
      %p34 = scmp.eq.s32.totalorder %s14, 0
      %p35 = por %p33, %p34
      %p36 = scmp.ne.s32.totalorder %s22, %s23
      %p37 = scmp.eq.s32.totalorder %s15, 1
      %p38 = por %p36, %p37
      %p40 = scmp.ne.s32.totalorder %s23, %s39
      %p41 = scmp.eq.s32.totalorder %s15, 0
      %p42 = por %p40, %p41
      %s44 = sadd.s32 %s43, 1
      %p47 = scmp.eq.s32.totalorder %s9, 1
      %p48 = scmp.ne.s32.totalorder %s43, %s45
      %p49 = scmp.eq.s32.totalorder %s9, 0
      %p50 = por %p48, %p49
      %p51 = scmp.ne.s32.totalorder %s43, %s45
      %p52 = scmp.eq.s32.totalorder %s14, 1
      %p53 = por %p51, %p52
      %p54 = scmp.ne.s32.totalorder %s45, %s46
      %p55 = scmp.eq.s32.totalorder %s14, 0
      %p56 = por %p54, %p55
      %p57 = scmp.ne.s32.totalorder %s45, %s46
      %p58 = scmp.eq.s32.totalorder %s15, 1
      %p59 = por %p57, %p58
      %p61 = scmp.ne.s32.totalorder %s46, %s60
      %p62 = scmp.eq.s32.totalorder %s15, 0
      %p63 = por %p61, %p62
      %s65 = sadd.s32 %s64, 1
      %p68 = scmp.eq.s32.totalorder %s9, 1
      %p69 = scmp.ne.s32.totalorder %s64, %s66
      %p70 = scmp.eq.s32.totalorder %s9, 0
      %p71 = por %p69, %p70
      %p72 = scmp.ne.s32.totalorder %s64, %s66
      %p73 = scmp.eq.s32.totalorder %s14, 1
      %p74 = por %p72, %p73
      %p75 = scmp.ne.s32.totalorder %s66, %s67
      %p76 = scmp.eq.s32.totalorder %s14, 0
      %p77 = por %p75, %p76
      %p78 = scmp.ne.s32.totalorder %s66, %s67
      %p79 = scmp.eq.s32.totalorder %s15, 1
      %p80 = por %p78, %p79
      %p82 = scmp.ne.s32.totalorder %s67, %s81
      %p83 = scmp.eq.s32.totalorder %s15, 0
      %p84 = por %p82, %p83
      %s85 = ssub.s32 %s9, %s16
      %p86 = scmp.eq.s32.totalorder %s85, 0
      %s88 = sadd.s32 %s87, 1
      %s89 = scalar_select %p86, %s87, %s88
      %p92 = pneg %p86
      %p93 = scmp.eq.s32.totalorder %s9, 1
      %p94 = por %p92, %p93
      %p95 = scmp.ne.s32.totalorder %s87, %s90
      %p96 = scmp.eq.s32.totalorder %s9, 0
      %p97 = por %p95, %p96
      %p98 = scmp.ne.s32.totalorder %s87, %s90
      %p99 = scmp.eq.s32.totalorder %s14, 1
      %p100 = por %p98, %p99
      %p101 = scmp.ne.s32.totalorder %s90, %s91
      %p102 = scmp.eq.s32.totalorder %s14, 0
      %p103 = por %p101, %p102
      %p104 = scmp.ne.s32.totalorder %s90, %s91
      %p105 = scmp.eq.s32.totalorder %s15, 1
      %p106 = por %p104, %p105
      %p108 = scmp.ne.s32.totalorder %s91, %s107
      %p109 = scmp.eq.s32.totalorder %s15, 0
      %p110 = por %p108, %p109
      %p111 = scmp.le.s32.totalorder 1, %s9
      %p112 = scmp.lt.s32.totalorder %s9, 3
      %p113 = pnand %p111, %p112
      %p114 = pneg %p113
      // Predicated region
      $region9: #{decoder_forward.1} parent=5 // pred_check
        _
      $region10: #{decoder_forward.1} parent=5 // pred_check_branch
        %116 = sbr.rel (%p113) target = $region12
      $region11: #{decoder_forward.1} parent=5 // pred_region
        %s117 = ssub.s32 %s9, 1
        // Predicated region
        $region13: #{decoder_forward.1} parent=11 // pred_check
          %p118 = pneg %p56
        $region14: #{decoder_forward.1} parent=11 // pred_check_branch
          %120 = sbr.rel (%p118) target = $region16
        $region15: #{decoder_forward.1} parent=11 // pred_region
          _
        $region16: #{decoder_forward.1} parent=11 // pred_fallthru
          _
        // Predicated region
        $region17: #{decoder_forward.1} parent=11 // pred_check
          %p121 = pneg %p77
        $region18: #{decoder_forward.1} parent=11 // pred_check_branch
          %123 = sbr.rel (%p121) target = $region20
        $region19: #{decoder_forward.1} parent=11 // pred_region
          _
        $region20: #{decoder_forward.1} parent=11 // pred_fallthru
          _
      $region12: #{decoder_forward.1} parent=5 // pred_fallthru
        _
      %p124 = scmp.lt.s32.totalorder %s9, 2
      // Predicated region
      $region21: #{decoder_forward.1} parent=5 // pred_check
        %p125 = pneg %p124
      $region22: #{decoder_forward.1} parent=5 // pred_check_branch
        %127 = sbr.rel (%p125) target = $region24
      $region23: #{decoder_forward.1} parent=5 // pred_region
        // Predicated region
        $region25: #{decoder_forward.1} parent=23 // pred_check
          %p128 = pneg %p29
        $region26: #{decoder_forward.1} parent=23 // pred_check_branch
          %130 = sbr.rel (%p128) target = $region28
        $region27: #{decoder_forward.1} parent=23 // pred_region
          %s131 = sand.u32 %s19, 1
          %s132 = sand.u32 %s19, 1
          %s133 = smul.addr %s132, 64
          %s134 = scalar_lea.vmem [#allocation3], %s133
          %s135 = smul.addr %s9, 8
          %s136 = scalar_lea.vmem %s0, %s135
          // Predicated region
          $region29: #{decoder_forward.1} parent=27 // pred_check
            _
          $region30: #{decoder_forward.1} parent=27 // pred_check_branch
            %138 = sbr.rel (0) target = $region32
          $region31: #{decoder_forward.1} parent=27 // pred_region
            // Predicated region
            $region33: #{decoder_forward.1} parent=31 // pred_check
              _
            $region34: #{decoder_forward.1} parent=31 // pred_check_branch
              %140 = sbr.rel (0) target = $region36
            $region35: #{decoder_forward.1} parent=31 // pred_region
              // Predicated region
              $region48: #{decoder_forward.1} parent=35 // pred_check
                _
              $region49: #{decoder_forward.1} parent=35 // pred_check_branch
                %170 = sbr.rel (0) target = $region51
              $region50: #{decoder_forward.1} parent=35 // pred_region
                loop: start=0, step=1, limit=1
                $region52: #{decoder_forward.1} parent=50 // loop_pre_header
                  _
                $region53: #{decoder_forward.1} parent=50 // loop_header
                  %s172 = sphi 0, %s176
                  %p173 = scmp.ge.s32.totalorder %s172, 1
                  %s177 = sphi %s136, %s136
                  %s178 = sphi %s134, %s134
                $region54: #{decoder_forward.1} parent=50 // loop_header_branch
                  %175 = sbr.rel (%p173) target = $region58
                $region55: #{decoder_forward.1} parent=50 // loop_body
                  %v179 = vld [vmem:[%s177] sm:$0xff]
                  %180 = vst [vmem:[%s178] sm:$0xff] %v179
                  %v181 = vld [vmem:[%s177 + $0x10] sm:$0xff]
                  %182 = vst [vmem:[%s178 + $0x8] sm:$0xff] %v181
                  %v183 = vld [vmem:[%s177 + $0x20] sm:$0xff]
                  %184 = vst [vmem:[%s178 + $0x10] sm:$0xff] %v183
                  %v185 = vld [vmem:[%s177 + $0x30] sm:$0xff]
                  %186 = vst [vmem:[%s178 + $0x18] sm:$0xff] %v185
                  %v187 = vld [vmem:[%s177 + $0x40] sm:$0xff]
                  %188 = vst [vmem:[%s178 + $0x20] sm:$0xff] %v187
                  %v189 = vld [vmem:[%s177 + $0x50] sm:$0xff]
                  %190 = vst [vmem:[%s178 + $0x28] sm:$0xff] %v189
                  %v191 = vld [vmem:[%s177 + $0x60] sm:$0xff]
                  %192 = vst [vmem:[%s178 + $0x30] sm:$0xff] %v191
                  %v193 = vld [vmem:[%s177 + $0x70] sm:$0xff]
                  %194 = vst [vmem:[%s178 + $0x38] sm:$0xff] %v193
                $region56: #{decoder_forward.1} parent=50 // loop_footer
                  %s176 = sadd.s32 1, %s172
                $region57: #{decoder_forward.1} parent=50 // loop_footer_branch
                  %171 = sbr.rel target = $region53
                $region58: #{decoder_forward.1} parent=50 // loop_exit
                  _
              $region51: #{decoder_forward.1} parent=35 // pred_fallthru
                _
              // Predicated region
              $region59: #{decoder_forward.1} parent=35 // pred_check
                _
              $region60: #{decoder_forward.1} parent=35 // pred_check_branch
                %196 = sbr.rel target = $region62
              $region61: #{decoder_forward.1} parent=35 // pred_region
                _
              $region62: #{decoder_forward.1} parent=35 // pred_fallthru
                _
            $region36: #{decoder_forward.1} parent=31 // pred_fallthru
              _
            // Predicated region
            $region37: #{decoder_forward.1} parent=31 // pred_check
              _
            $region38: #{decoder_forward.1} parent=31 // pred_check_branch
              %142 = sbr.rel target = $region40
            $region39: #{decoder_forward.1} parent=31 // pred_region
              %s144 = ssub.s32 256, 1
              loop: start=0, step=1, limit=1
              $region41: #{decoder_forward.1} parent=39 // loop_pre_header
                _
              $region42: #{decoder_forward.1} parent=39 // loop_header
                %s146 = sphi 0, %s150
                %p147 = scmp.ge.s32.totalorder %s146, 1
                %s151 = sphi %s136, %s136
                %s152 = sphi %s134, %s134
              $region43: #{decoder_forward.1} parent=39 // loop_header_branch
                %149 = sbr.rel (%p147) target = $region47
              $region44: #{decoder_forward.1} parent=39 // loop_body
                %v153 = vld [vmem:[%s151] sm:%s144]
                %154 = vst [vmem:[%s152] sm:%s144] %v153
                %v155 = vld [vmem:[%s151 + $0x10] sm:%s144]
                %156 = vst [vmem:[%s152 + $0x8] sm:%s144] %v155
                %v157 = vld [vmem:[%s151 + $0x20] sm:%s144]
                %158 = vst [vmem:[%s152 + $0x10] sm:%s144] %v157
                %v159 = vld [vmem:[%s151 + $0x30] sm:%s144]
                %160 = vst [vmem:[%s152 + $0x18] sm:%s144] %v159
                %v161 = vld [vmem:[%s151 + $0x40] sm:%s144]
                %162 = vst [vmem:[%s152 + $0x20] sm:%s144] %v161
                %v163 = vld [vmem:[%s151 + $0x50] sm:%s144]
                %164 = vst [vmem:[%s152 + $0x28] sm:%s144] %v163
                %v165 = vld [vmem:[%s151 + $0x60] sm:%s144]
                %166 = vst [vmem:[%s152 + $0x30] sm:%s144] %v165
                %v167 = vld [vmem:[%s151 + $0x70] sm:%s144]
                %168 = vst [vmem:[%s152 + $0x38] sm:%s144] %v167
              $region45: #{decoder_forward.1} parent=39 // loop_footer
                %s150 = sadd.s32 1, %s146
              $region46: #{decoder_forward.1} parent=39 // loop_footer_branch
                %145 = sbr.rel target = $region42
              $region47: #{decoder_forward.1} parent=39 // loop_exit
                _
            $region40: #{decoder_forward.1} parent=31 // pred_fallthru
              _
          $region32: #{decoder_forward.1} parent=27 // pred_fallthru
            _
          %197 = vnop
        $region28: #{decoder_forward.1} parent=23 // pred_fallthru
          _
      $region24: #{decoder_forward.1} parent=5 // pred_fallthru
        _
      %p198 = scmp.le.s32.totalorder 1, %s9
      %p199 = scmp.lt.s32.totalorder %s9, 3
      %p200 = pnand %p198, %p199
      %p201 = pneg %p200
      // Predicated region
      $region63: #{decoder_forward.1} parent=5 // pred_check
        _
      $region64: #{decoder_forward.1} parent=5 // pred_check_branch
        %203 = sbr.rel (%p200) target = $region66
      $region65: #{decoder_forward.1} parent=5 // pred_region
        %s204 = ssub.s32 %s9, 1
        %s205 = sand.u32 %s22, 1
        %s206 = sand.u32 %s22, 1
        %s207 = smul.addr %s206, 64
        %s208 = scalar_lea.vmem [#allocation3], %s207
        // Predicated region
        $region67: #{decoder_forward.1} parent=65 // pred_check
          %p209 = pneg %p35
        $region68: #{decoder_forward.1} parent=65 // pred_check_branch
          %211 = sbr.rel (%p209) target = $region70
        $region69: #{decoder_forward.1} parent=65 // pred_region
          _
        $region70: #{decoder_forward.1} parent=65 // pred_fallthru
          _
        %s212 = sand.u32 %s22, 1
        %s213 = sand.u32 %s22, 1
        %s214 = smul.addr %s213, 64
        %s215 = scalar_lea.vmem [#allocation3], %s214
        %p216 = pneg %p35
        %p217 = pneg %p32
        %p218 = pneg %p56
        %p219 = pneg %p53
        %p220 = pneg %p77
        %p221 = pneg %p74
        %p222 = pneg %p103
        %p223 = pneg %p100
        %p224 = scmp.lt.s32.totalorder %s14, 1
        %s225 = scalar_select %p224, %s14, 1
        %s226 = smul.addr %s225, 8
        %s227 = scalar_lea.vmem %s3, %s226
        %p228 = scmp.lt.s32.totalorder %s14, 1
        %s229 = scalar_select %p228, %s14, 1
        %s230 = smul.addr %s229, 8
        %s231 = scalar_lea.vmem %s3, %s230
        %v232 = vld [vmem:[%s208] sm:$0xff]
        %v233 = vld [vmem:[%s208 + $0x8] sm:$0xff]
        %v234 = vld [vmem:[%s208 + $0x10] sm:$0xff]
        %v235 = vld [vmem:[%s208 + $0x18] sm:$0xff]
        %v236 = vld [vmem:[%s208 + $0x20] sm:$0xff]
        %v237 = vld [vmem:[%s208 + $0x28] sm:$0xff]
        %v238 = vld [vmem:[%s208 + $0x30] sm:$0xff]
        %v239 = vld [vmem:[%s208 + $0x38] sm:$0xff]
        %248 = vrot.lane.b32.xlu0 %v232, 11
        %v249 = vpop.permute.xlu0 %248
        %250 = vrot.lane.b32.xlu0 %v233, 11
        %v251 = vpop.permute.xlu0 %250
        %252 = vrot.lane.b32.xlu0 %v234, 11
        %v253 = vpop.permute.xlu0 %252
        %254 = vrot.lane.b32.xlu0 %v235, 11
        %v255 = vpop.permute.xlu0 %254
        %256 = vrot.lane.b32.xlu0 %v236, 11
        %v257 = vpop.permute.xlu0 %256
        %258 = vrot.lane.b32.xlu0 %v237, 11
        %v259 = vpop.permute.xlu0 %258
        %260 = vrot.lane.b32.xlu0 %v238, 11
        %v261 = vpop.permute.xlu0 %260
        %262 = vrot.lane.b32.xlu0 %v239, 11
        %v263 = vpop.permute.xlu0 %262
        %vm272 = vcmask 1047640
        %273 = vst.msk [vmem:[#allocation2] sm:$0xff] %vm272, %v249
        %274 = vst.msk [vmem:[#allocation2 + $0x8] sm:$0xff] %vm272, %v251
        %275 = vst.msk [vmem:[#allocation2 + $0x10] sm:$0xff] %vm272, %v253
        %276 = vst.msk [vmem:[#allocation2 + $0x18] sm:$0xff] %vm272, %v255
        %277 = vst.msk [vmem:[#allocation2 + $0x20] sm:$0xff] %vm272, %v257
        %278 = vst.msk [vmem:[#allocation2 + $0x28] sm:$0xff] %vm272, %v259
        %279 = vst.msk [vmem:[#allocation2 + $0x30] sm:$0xff] %vm272, %v261
        %280 = vst.msk [vmem:[#allocation2 + $0x38] sm:$0xff] %vm272, %v263
        %v281 = vld [vmem:[%s208] sm:$0xff]
        %v282 = vld [vmem:[%s208 + $0x8] sm:$0xff]
        %v283 = vld [vmem:[%s208 + $0x10] sm:$0xff]
        %v284 = vld [vmem:[%s208 + $0x18] sm:$0xff]
        %v285 = vld [vmem:[%s208 + $0x20] sm:$0xff]
        %v286 = vld [vmem:[%s208 + $0x28] sm:$0xff]
        %v287 = vld [vmem:[%s208 + $0x30] sm:$0xff]
        %v288 = vld [vmem:[%s208 + $0x38] sm:$0xff]
        %297 = vrot.lane.b32.xlu0 %v281, 10
        %v298 = vpop.permute.xlu0 %297
        %299 = vrot.lane.b32.xlu0 %v282, 10
        %v300 = vpop.permute.xlu0 %299
        %301 = vrot.lane.b32.xlu0 %v283, 10
        %v302 = vpop.permute.xlu0 %301
        %303 = vrot.lane.b32.xlu0 %v284, 10
        %v304 = vpop.permute.xlu0 %303
        %305 = vrot.lane.b32.xlu0 %v285, 10
        %v306 = vpop.permute.xlu0 %305
        %307 = vrot.lane.b32.xlu0 %v286, 10
        %v308 = vpop.permute.xlu0 %307
        %309 = vrot.lane.b32.xlu0 %v287, 10
        %v310 = vpop.permute.xlu0 %309
        %311 = vrot.lane.b32.xlu0 %v288, 10
        %v312 = vpop.permute.xlu0 %311
        %vm321 = vcmask 1047632
        %322 = vst.msk [vmem:[#allocation2 + $0x40] sm:$0xff] %vm321, %v298
        %323 = vst.msk [vmem:[#allocation2 + $0x48] sm:$0xff] %vm321, %v300
        %324 = vst.msk [vmem:[#allocation2 + $0x50] sm:$0xff] %vm321, %v302
        %325 = vst.msk [vmem:[#allocation2 + $0x58] sm:$0xff] %vm321, %v304
        %326 = vst.msk [vmem:[#allocation2 + $0x60] sm:$0xff] %vm321, %v306
        %327 = vst.msk [vmem:[#allocation2 + $0x68] sm:$0xff] %vm321, %v308
        %328 = vst.msk [vmem:[#allocation2 + $0x70] sm:$0xff] %vm321, %v310
        %329 = vst.msk [vmem:[#allocation2 + $0x78] sm:$0xff] %vm321, %v312
        %v330 = vld [vmem:[%s208] sm:$0xff]
        %v331 = vld [vmem:[%s208 + $0x8] sm:$0xff]
        %v332 = vld [vmem:[%s208 + $0x10] sm:$0xff]
        %v333 = vld [vmem:[%s208 + $0x18] sm:$0xff]
        %v334 = vld [vmem:[%s208 + $0x20] sm:$0xff]
        %v335 = vld [vmem:[%s208 + $0x28] sm:$0xff]
        %v336 = vld [vmem:[%s208 + $0x30] sm:$0xff]
        %v337 = vld [vmem:[%s208 + $0x38] sm:$0xff]
        %346 = vrot.lane.b32.xlu0 %v330, 9
        %v347 = vpop.permute.xlu0 %346
        %348 = vrot.lane.b32.xlu0 %v331, 9
        %v349 = vpop.permute.xlu0 %348
        %350 = vrot.lane.b32.xlu0 %v332, 9
        %v351 = vpop.permute.xlu0 %350
        %352 = vrot.lane.b32.xlu0 %v333, 9
        %v353 = vpop.permute.xlu0 %352
        %354 = vrot.lane.b32.xlu0 %v334, 9
        %v355 = vpop.permute.xlu0 %354
        %356 = vrot.lane.b32.xlu0 %v335, 9
        %v357 = vpop.permute.xlu0 %356
        %358 = vrot.lane.b32.xlu0 %v336, 9
        %v359 = vpop.permute.xlu0 %358
        %360 = vrot.lane.b32.xlu0 %v337, 9
        %v361 = vpop.permute.xlu0 %360
        %vm370 = vcmask 1047624
        %371 = vst.msk [vmem:[#allocation2 + $0x80] sm:$0xff] %vm370, %v347
        %372 = vst.msk [vmem:[#allocation2 + $0x88] sm:$0xff] %vm370, %v349
        %373 = vst.msk [vmem:[#allocation2 + $0x90] sm:$0xff] %vm370, %v351
        %374 = vst.msk [vmem:[#allocation2 + $0x98] sm:$0xff] %vm370, %v353
        %375 = vst.msk [vmem:[#allocation2 + $0xa0] sm:$0xff] %vm370, %v355
        %376 = vst.msk [vmem:[#allocation2 + $0xa8] sm:$0xff] %vm370, %v357
        %377 = vst.msk [vmem:[#allocation2 + $0xb0] sm:$0xff] %vm370, %v359
        %378 = vst.msk [vmem:[#allocation2 + $0xb8] sm:$0xff] %vm370, %v361
        %v379 = vld [vmem:[%s208] sm:$0xff]
        %v380 = vld [vmem:[%s208 + $0x8] sm:$0xff]
        %v381 = vld [vmem:[%s208 + $0x10] sm:$0xff]
        %v382 = vld [vmem:[%s208 + $0x18] sm:$0xff]
        %v383 = vld [vmem:[%s208 + $0x20] sm:$0xff]
        %v384 = vld [vmem:[%s208 + $0x28] sm:$0xff]
        %v385 = vld [vmem:[%s208 + $0x30] sm:$0xff]
        %v386 = vld [vmem:[%s208 + $0x38] sm:$0xff]
        %395 = vrot.lane.b32.xlu0 %v379, 1
        %v396 = vpop.permute.xlu0 %395
        %397 = vrot.lane.b32.xlu0 %v380, 1
        %v398 = vpop.permute.xlu0 %397
        %399 = vrot.lane.b32.xlu0 %v381, 1
        %v400 = vpop.permute.xlu0 %399
        %401 = vrot.lane.b32.xlu0 %v382, 1
        %v402 = vpop.permute.xlu0 %401
        %403 = vrot.lane.b32.xlu0 %v383, 1
        %v404 = vpop.permute.xlu0 %403
        %405 = vrot.lane.b32.xlu0 %v384, 1
        %v406 = vpop.permute.xlu0 %405
        %407 = vrot.lane.b32.xlu0 %v385, 1
        %v408 = vpop.permute.xlu0 %407
        %409 = vrot.lane.b32.xlu0 %v386, 1
        %v410 = vpop.permute.xlu0 %409
        %vm419 = vcmask 1047560
        %420 = vst.msk [vmem:[#allocation2 + $0xc0] sm:$0xff] %vm419, %v396
        %421 = vst.msk [vmem:[#allocation2 + $0xc8] sm:$0xff] %vm419, %v398
        %422 = vst.msk [vmem:[#allocation2 + $0xd0] sm:$0xff] %vm419, %v400
        %423 = vst.msk [vmem:[#allocation2 + $0xd8] sm:$0xff] %vm419, %v402
        %424 = vst.msk [vmem:[#allocation2 + $0xe0] sm:$0xff] %vm419, %v404
        %425 = vst.msk [vmem:[#allocation2 + $0xe8] sm:$0xff] %vm419, %v406
        %426 = vst.msk [vmem:[#allocation2 + $0xf0] sm:$0xff] %vm419, %v408
        %427 = vst.msk [vmem:[#allocation2 + $0xf8] sm:$0xff] %vm419, %v410
        %v428 = vld [vmem:[%s208] sm:$0xff]
        %v429 = vld [vmem:[%s208 + $0x8] sm:$0xff]
        %v430 = vld [vmem:[%s208 + $0x10] sm:$0xff]
        %v431 = vld [vmem:[%s208 + $0x18] sm:$0xff]
        %v432 = vld [vmem:[%s208 + $0x20] sm:$0xff]
        %v433 = vld [vmem:[%s208 + $0x28] sm:$0xff]
        %v434 = vld [vmem:[%s208 + $0x30] sm:$0xff]
        %v435 = vld [vmem:[%s208 + $0x38] sm:$0xff]
        %436 = vst [vmem:[#allocation2 + $0x100] sm:$0xff] %v428
        %437 = vst [vmem:[#allocation2 + $0x108] sm:$0xff] %v429
        %438 = vst [vmem:[#allocation2 + $0x110] sm:$0xff] %v430
        %439 = vst [vmem:[#allocation2 + $0x118] sm:$0xff] %v431
        %440 = vst [vmem:[#allocation2 + $0x120] sm:$0xff] %v432
        %441 = vst [vmem:[#allocation2 + $0x128] sm:$0xff] %v433
        %442 = vst [vmem:[#allocation2 + $0x130] sm:$0xff] %v434
        %443 = vst [vmem:[#allocation2 + $0x138] sm:$0xff] %v435
        %v444 = vld [vmem:[%s208] sm:$0xff]
        %v445 = vld [vmem:[%s208 + $0x8] sm:$0xff]
        %v446 = vld [vmem:[%s208 + $0x10] sm:$0xff]
        %v447 = vld [vmem:[%s208 + $0x18] sm:$0xff]
        %v448 = vld [vmem:[%s208 + $0x20] sm:$0xff]
        %v449 = vld [vmem:[%s208 + $0x28] sm:$0xff]
        %v450 = vld [vmem:[%s208 + $0x30] sm:$0xff]
        %v451 = vld [vmem:[%s208 + $0x38] sm:$0xff]
        %460 = vrot.lane.b32.xlu0 %v444, 127
        %v461 = vpop.permute.xlu0 %460
        %462 = vrot.lane.b32.xlu0 %v445, 127
        %v463 = vpop.permute.xlu0 %462
        %464 = vrot.lane.b32.xlu0 %v446, 127
        %v465 = vpop.permute.xlu0 %464
        %466 = vrot.lane.b32.xlu0 %v447, 127
        %v467 = vpop.permute.xlu0 %466
        %468 = vrot.lane.b32.xlu0 %v448, 127
        %v469 = vpop.permute.xlu0 %468
        %470 = vrot.lane.b32.xlu0 %v449, 127
        %v471 = vpop.permute.xlu0 %470
        %472 = vrot.lane.b32.xlu0 %v450, 127
        %v473 = vpop.permute.xlu0 %472
        %474 = vrot.lane.b32.xlu0 %v451, 127
        %v475 = vpop.permute.xlu0 %474
        %vm484 = vcmask 1039360
        %485 = vst.msk [vmem:[#allocation2 + $0x140] sm:$0xff] %vm484, %v461
        %486 = vst.msk [vmem:[#allocation2 + $0x148] sm:$0xff] %vm484, %v463
        %487 = vst.msk [vmem:[#allocation2 + $0x150] sm:$0xff] %vm484, %v465
        %488 = vst.msk [vmem:[#allocation2 + $0x158] sm:$0xff] %vm484, %v467
        %489 = vst.msk [vmem:[#allocation2 + $0x160] sm:$0xff] %vm484, %v469
        %490 = vst.msk [vmem:[#allocation2 + $0x168] sm:$0xff] %vm484, %v471
        %491 = vst.msk [vmem:[#allocation2 + $0x170] sm:$0xff] %vm484, %v473
        %492 = vst.msk [vmem:[#allocation2 + $0x178] sm:$0xff] %vm484, %v475
        %v493 = vld [vmem:[%s208] sm:$0xff]
        %v494 = vld [vmem:[%s208 + $0x8] sm:$0xff]
        %v495 = vld [vmem:[%s208 + $0x10] sm:$0xff]
        %v496 = vld [vmem:[%s208 + $0x18] sm:$0xff]
        %v497 = vld [vmem:[%s208 + $0x20] sm:$0xff]
        %v498 = vld [vmem:[%s208 + $0x28] sm:$0xff]
        %v499 = vld [vmem:[%s208 + $0x30] sm:$0xff]
        %v500 = vld [vmem:[%s208 + $0x38] sm:$0xff]
        %509 = vrot.lane.b32.xlu0 %v493, 119
        %v510 = vpop.permute.xlu0 %509
        %511 = vrot.lane.b32.xlu0 %v494, 119
        %v512 = vpop.permute.xlu0 %511
        %513 = vrot.lane.b32.xlu0 %v495, 119
        %v514 = vpop.permute.xlu0 %513
        %515 = vrot.lane.b32.xlu0 %v496, 119
        %v516 = vpop.permute.xlu0 %515
        %517 = vrot.lane.b32.xlu0 %v497, 119
        %v518 = vpop.permute.xlu0 %517
        %519 = vrot.lane.b32.xlu0 %v498, 119
        %v520 = vpop.permute.xlu0 %519
        %521 = vrot.lane.b32.xlu0 %v499, 119
        %v522 = vpop.permute.xlu0 %521
        %523 = vrot.lane.b32.xlu0 %v500, 119
        %v524 = vpop.permute.xlu0 %523
        %vm533 = vcmask 973824
        %534 = vst.msk [vmem:[#allocation2 + $0x180] sm:$0xff] %vm533, %v510
        %535 = vst.msk [vmem:[#allocation2 + $0x188] sm:$0xff] %vm533, %v512
        %536 = vst.msk [vmem:[#allocation2 + $0x190] sm:$0xff] %vm533, %v514
        %537 = vst.msk [vmem:[#allocation2 + $0x198] sm:$0xff] %vm533, %v516
        %538 = vst.msk [vmem:[#allocation2 + $0x1a0] sm:$0xff] %vm533, %v518
        %539 = vst.msk [vmem:[#allocation2 + $0x1a8] sm:$0xff] %vm533, %v520
        %540 = vst.msk [vmem:[#allocation2 + $0x1b0] sm:$0xff] %vm533, %v522
        %541 = vst.msk [vmem:[#allocation2 + $0x1b8] sm:$0xff] %vm533, %v524
        %v542 = vld [vmem:[%s208] sm:$0xff]
        %v543 = vld [vmem:[%s208 + $0x8] sm:$0xff]
        %v544 = vld [vmem:[%s208 + $0x10] sm:$0xff]
        %v545 = vld [vmem:[%s208 + $0x18] sm:$0xff]
        %v546 = vld [vmem:[%s208 + $0x20] sm:$0xff]
        %v547 = vld [vmem:[%s208 + $0x28] sm:$0xff]
        %v548 = vld [vmem:[%s208 + $0x30] sm:$0xff]
        %v549 = vld [vmem:[%s208 + $0x38] sm:$0xff]
        %558 = vrot.lane.b32.xlu0 %v542, 118
        %v559 = vpop.permute.xlu0 %558
        %560 = vrot.lane.b32.xlu0 %v543, 118
        %v561 = vpop.permute.xlu0 %560
        %562 = vrot.lane.b32.xlu0 %v544, 118
        %v563 = vpop.permute.xlu0 %562
        %564 = vrot.lane.b32.xlu0 %v545, 118
        %v565 = vpop.permute.xlu0 %564
        %566 = vrot.lane.b32.xlu0 %v546, 118
        %v567 = vpop.permute.xlu0 %566
        %568 = vrot.lane.b32.xlu0 %v547, 118
        %v569 = vpop.permute.xlu0 %568
        %570 = vrot.lane.b32.xlu0 %v548, 118
        %v571 = vpop.permute.xlu0 %570
        %572 = vrot.lane.b32.xlu0 %v549, 118
        %v573 = vpop.permute.xlu0 %572
        %vm582 = vcmask 965632
        %583 = vst.msk [vmem:[#allocation2 + $0x1c0] sm:$0xff] %vm582, %v559
        %584 = vst.msk [vmem:[#allocation2 + $0x1c8] sm:$0xff] %vm582, %v561
        %585 = vst.msk [vmem:[#allocation2 + $0x1d0] sm:$0xff] %vm582, %v563
        %586 = vst.msk [vmem:[#allocation2 + $0x1d8] sm:$0xff] %vm582, %v565
        %587 = vst.msk [vmem:[#allocation2 + $0x1e0] sm:$0xff] %vm582, %v567
        %588 = vst.msk [vmem:[#allocation2 + $0x1e8] sm:$0xff] %vm582, %v569
        %589 = vst.msk [vmem:[#allocation2 + $0x1f0] sm:$0xff] %vm582, %v571
        %590 = vst.msk [vmem:[#allocation2 + $0x1f8] sm:$0xff] %vm582, %v573
        %v591 = vld [vmem:[%s208] sm:$0xff]
        %v592 = vld [vmem:[%s208 + $0x8] sm:$0xff]
        %v593 = vld [vmem:[%s208 + $0x10] sm:$0xff]
        %v594 = vld [vmem:[%s208 + $0x18] sm:$0xff]
        %v595 = vld [vmem:[%s208 + $0x20] sm:$0xff]
        %v596 = vld [vmem:[%s208 + $0x28] sm:$0xff]
        %v597 = vld [vmem:[%s208 + $0x30] sm:$0xff]
        %v598 = vld [vmem:[%s208 + $0x38] sm:$0xff]
        %607 = vrot.lane.b32.xlu0 %v591, 117
        %v608 = vpop.permute.xlu0 %607
        %609 = vrot.lane.b32.xlu0 %v592, 117
        %v610 = vpop.permute.xlu0 %609
        %611 = vrot.lane.b32.xlu0 %v593, 117
        %v612 = vpop.permute.xlu0 %611
        %613 = vrot.lane.b32.xlu0 %v594, 117
        %v614 = vpop.permute.xlu0 %613
        %615 = vrot.lane.b32.xlu0 %v595, 117
        %v616 = vpop.permute.xlu0 %615
        %617 = vrot.lane.b32.xlu0 %v596, 117
        %v618 = vpop.permute.xlu0 %617
        %619 = vrot.lane.b32.xlu0 %v597, 117
        %v620 = vpop.permute.xlu0 %619
        %621 = vrot.lane.b32.xlu0 %v598, 117
        %v622 = vpop.permute.xlu0 %621
        %vm631 = vcmask 957440
        %632 = vst.msk [vmem:[#allocation2 + $0x200] sm:$0xff] %vm631, %v608
        %633 = vst.msk [vmem:[#allocation2 + $0x208] sm:$0xff] %vm631, %v610
        %634 = vst.msk [vmem:[#allocation2 + $0x210] sm:$0xff] %vm631, %v612
        %635 = vst.msk [vmem:[#allocation2 + $0x218] sm:$0xff] %vm631, %v614
        %636 = vst.msk [vmem:[#allocation2 + $0x220] sm:$0xff] %vm631, %v616
        %637 = vst.msk [vmem:[#allocation2 + $0x228] sm:$0xff] %vm631, %v618
        %638 = vst.msk [vmem:[#allocation2 + $0x230] sm:$0xff] %vm631, %v620
        %639 = vst.msk [vmem:[#allocation2 + $0x238] sm:$0xff] %vm631, %v622
        %v640 = vld [vmem:[%s1] sm:$0xff]
        %v641 = vld [vmem:[%s1 + $0x8] sm:$0xff]
        %v642 = vld [vmem:[%s1 + $0x10] sm:$0xff]
        %v643 = vld [vmem:[%s1 + $0x18] sm:$0xff]
        %v644 = vld [vmem:[%s1 + $0x20] sm:$0xff]
        %v645 = vld [vmem:[#allocation2] sm:$0xff]
        %v646 = vld [vmem:[#allocation2 + $0x8] sm:$0xff]
        %v647 = vld [vmem:[#allocation2 + $0x10] sm:$0xff]
        %v648 = vld [vmem:[#allocation2 + $0x18] sm:$0xff]
        %v649 = vld [vmem:[#allocation2 + $0x20] sm:$0xff]
        %v650 = vld [vmem:[#allocation2 + $0x28] sm:$0xff]
        %v651 = vld [vmem:[#allocation2 + $0x30] sm:$0xff]
        %v652 = vld [vmem:[#allocation2 + $0x38] sm:$0xff]
        %v653 = vld [vmem:[#allocation2 + $0x40] sm:$0xff]
        %v654 = vld [vmem:[#allocation2 + $0x48] sm:$0xff]
        %v655 = vld [vmem:[#allocation2 + $0x50] sm:$0xff]
        %v656 = vld [vmem:[#allocation2 + $0x58] sm:$0xff]
        %v657 = vld [vmem:[#allocation2 + $0x60] sm:$0xff]
        %v658 = vld [vmem:[#allocation2 + $0x68] sm:$0xff]
        %v659 = vld [vmem:[#allocation2 + $0x70] sm:$0xff]
        %v660 = vld [vmem:[#allocation2 + $0x78] sm:$0xff]
        %v661 = vld [vmem:[#allocation2 + $0x80] sm:$0xff]
        %v662 = vld [vmem:[#allocation2 + $0x88] sm:$0xff]
        %v663 = vld [vmem:[#allocation2 + $0x90] sm:$0xff]
        %v664 = vld [vmem:[#allocation2 + $0x98] sm:$0xff]
        %v665 = vld [vmem:[#allocation2 + $0xa0] sm:$0xff]
        %v666 = vld [vmem:[#allocation2 + $0xa8] sm:$0xff]
        %v667 = vld [vmem:[#allocation2 + $0xb0] sm:$0xff]
        %v668 = vld [vmem:[#allocation2 + $0xb8] sm:$0xff]
        %v669 = vld [vmem:[#allocation2 + $0xc0] sm:$0xff]
        %v670 = vld [vmem:[#allocation2 + $0xc8] sm:$0xff]
        %v671 = vld [vmem:[#allocation2 + $0xd0] sm:$0xff]
        %v672 = vld [vmem:[#allocation2 + $0xd8] sm:$0xff]
        %v673 = vld [vmem:[#allocation2 + $0xe0] sm:$0xff]
        %v674 = vld [vmem:[#allocation2 + $0xe8] sm:$0xff]
        %v675 = vld [vmem:[#allocation2 + $0xf0] sm:$0xff]
        %v676 = vld [vmem:[#allocation2 + $0xf8] sm:$0xff]
        %v677 = vld [vmem:[#allocation2 + $0x100] sm:$0xff]
        %v678 = vld [vmem:[#allocation2 + $0x108] sm:$0xff]
        %v679 = vld [vmem:[#allocation2 + $0x110] sm:$0xff]
        %v680 = vld [vmem:[#allocation2 + $0x118] sm:$0xff]
        %v681 = vld [vmem:[#allocation2 + $0x120] sm:$0xff]
        %v682 = vld [vmem:[#allocation2 + $0x128] sm:$0xff]
        %v683 = vld [vmem:[#allocation2 + $0x130] sm:$0xff]
        %v684 = vld [vmem:[#allocation2 + $0x138] sm:$0xff]
        %v685 = vld [vmem:[#allocation2 + $0x140] sm:$0xff]
        %v686 = vld [vmem:[#allocation2 + $0x148] sm:$0xff]
        %v687 = vld [vmem:[#allocation2 + $0x150] sm:$0xff]
        %v688 = vld [vmem:[#allocation2 + $0x158] sm:$0xff]
        %v689 = vld [vmem:[#allocation2 + $0x160] sm:$0xff]
        %v690 = vld [vmem:[#allocation2 + $0x168] sm:$0xff]
        %v691 = vld [vmem:[#allocation2 + $0x170] sm:$0xff]
        %v692 = vld [vmem:[#allocation2 + $0x178] sm:$0xff]
        %v693 = vld [vmem:[#allocation2 + $0x180] sm:$0xff]
        %v694 = vld [vmem:[#allocation2 + $0x188] sm:$0xff]
        %v695 = vld [vmem:[#allocation2 + $0x190] sm:$0xff]
        %v696 = vld [vmem:[#allocation2 + $0x198] sm:$0xff]
        %v697 = vld [vmem:[#allocation2 + $0x1a0] sm:$0xff]
        %v698 = vld [vmem:[#allocation2 + $0x1a8] sm:$0xff]
        %v699 = vld [vmem:[#allocation2 + $0x1b0] sm:$0xff]
        %v700 = vld [vmem:[#allocation2 + $0x1b8] sm:$0xff]
        %v701 = vld [vmem:[#allocation2 + $0x1c0] sm:$0xff]
        %v702 = vld [vmem:[#allocation2 + $0x1c8] sm:$0xff]
        %v703 = vld [vmem:[#allocation2 + $0x1d0] sm:$0xff]
        %v704 = vld [vmem:[#allocation2 + $0x1d8] sm:$0xff]
        %v705 = vld [vmem:[#allocation2 + $0x1e0] sm:$0xff]
        %v706 = vld [vmem:[#allocation2 + $0x1e8] sm:$0xff]
        %v707 = vld [vmem:[#allocation2 + $0x1f0] sm:$0xff]
        %v708 = vld [vmem:[#allocation2 + $0x1f8] sm:$0xff]
        %v709 = vld [vmem:[#allocation2 + $0x200] sm:$0xff]
        %v710 = vld [vmem:[#allocation2 + $0x208] sm:$0xff]
        %v711 = vld [vmem:[#allocation2 + $0x210] sm:$0xff]
        %v712 = vld [vmem:[#allocation2 + $0x218] sm:$0xff]
        %v713 = vld [vmem:[#allocation2 + $0x220] sm:$0xff]
        %v714 = vld [vmem:[#allocation2 + $0x228] sm:$0xff]
        %v715 = vld [vmem:[#allocation2 + $0x230] sm:$0xff]
        %v716 = vld [vmem:[#allocation2 + $0x238] sm:$0xff]
        %v717 = vld [vmem:[%s2] sm:$0xff]
        %719 = vset.pattern.permute.xlu0 0
        %720 = vperm.xlu0 %719, %v717
        %v721 = vpop.permute.xlu0 %720
        %vm723 = vcmask 523264
        %v725 = vsel %vm723, %v644, 0
        %727 = vmatpush.msra.mxu0 %v660
        %728 = vmatpush.msra.mxu0 %v659
        %729 = vmatpush.msra.mxu0 %v658
        %730 = vmatpush.msra.mxu0 %v657
        %731 = vmatpush.msra.mxu0 %v656
        %732 = vmatpush.msra.mxu0 %v655
        %733 = vmatpush.msra.mxu0 %v654
        %734 = vmatpush.msra.mxu0 %v653
        %735 = vmatpush.msra.mxu0 %v652
        %736 = vmatpush.msra.mxu0 %v651
        %737 = vmatpush.msra.mxu0 %v650
        %738 = vmatpush.msra.mxu0 %v649
        %739 = vmatpush.msra.mxu0 %v648
        %740 = vmatpush.msra.mxu0 %v647
        %741 = vmatpush.msra.mxu0 %v646
        %742 = vmatpush.msra.mxu0 %v645
        %743 = vmatmul.f32.gmra.mxu0 %v640
        %v744 = vpop.f32.mrf.mxu0
        %v745 = vadd.f32 %v721, %v744
        %746 = vdwg.mxu0
        %747 = vmatpush.msra.mxu0 %v676
        %748 = vmatpush.msra.mxu0 %v675
        %749 = vmatpush.msra.mxu0 %v674
        %750 = vmatpush.msra.mxu0 %v673
        %751 = vmatpush.msra.mxu0 %v672
        %752 = vmatpush.msra.mxu0 %v671
        %753 = vmatpush.msra.mxu0 %v670
        %754 = vmatpush.msra.mxu0 %v669
        %755 = vmatpush.msra.mxu0 %v668
        %756 = vmatpush.msra.mxu0 %v667
        %757 = vmatpush.msra.mxu0 %v666
        %758 = vmatpush.msra.mxu0 %v665
        %759 = vmatpush.msra.mxu0 %v664
        %760 = vmatpush.msra.mxu0 %v663
        %761 = vmatpush.msra.mxu0 %v662
        %762 = vmatpush.msra.mxu0 %v661
        %763 = vmatmul.f32.gmra.mxu0 %v641
        %v764 = vpop.f32.mrf.mxu0
        %v765 = vadd.f32 %v745, %v764
        %766 = vdwg.mxu0
        %767 = vmatpush.msra.mxu0 %v692
        %768 = vmatpush.msra.mxu0 %v691
        %769 = vmatpush.msra.mxu0 %v690
        %770 = vmatpush.msra.mxu0 %v689
        %771 = vmatpush.msra.mxu0 %v688
        %772 = vmatpush.msra.mxu0 %v687
        %773 = vmatpush.msra.mxu0 %v686
        %774 = vmatpush.msra.mxu0 %v685
        %775 = vmatpush.msra.mxu0 %v684
        %776 = vmatpush.msra.mxu0 %v683
        %777 = vmatpush.msra.mxu0 %v682
        %778 = vmatpush.msra.mxu0 %v681
        %779 = vmatpush.msra.mxu0 %v680
        %780 = vmatpush.msra.mxu0 %v679
        %781 = vmatpush.msra.mxu0 %v678
        %782 = vmatpush.msra.mxu0 %v677
        %783 = vmatmul.f32.gmra.mxu0 %v642
        %v784 = vpop.f32.mrf.mxu0
        %v785 = vadd.f32 %v765, %v784
        %786 = vdwg.mxu0
        %787 = vmatpush.msra.mxu0 %v708
        %788 = vmatpush.msra.mxu0 %v707
        %789 = vmatpush.msra.mxu0 %v706
        %790 = vmatpush.msra.mxu0 %v705
        %791 = vmatpush.msra.mxu0 %v704
        %792 = vmatpush.msra.mxu0 %v703
        %793 = vmatpush.msra.mxu0 %v702
        %794 = vmatpush.msra.mxu0 %v701
        %795 = vmatpush.msra.mxu0 %v700
        %796 = vmatpush.msra.mxu0 %v699
        %797 = vmatpush.msra.mxu0 %v698
        %798 = vmatpush.msra.mxu0 %v697
        %799 = vmatpush.msra.mxu0 %v696
        %800 = vmatpush.msra.mxu0 %v695
        %801 = vmatpush.msra.mxu0 %v694
        %802 = vmatpush.msra.mxu0 %v693
        %803 = vmatmul.f32.gmra.mxu0 %v643
        %v804 = vpop.f32.mrf.mxu0
        %v805 = vadd.f32 %v785, %v804
        %806 = vdwg.mxu0
        %807 = vmatpush.msra.mxu0 0.0
        %808 = vmatpush.msra.mxu0 0.0
        %809 = vmatpush.msra.mxu0 0.0
        %810 = vmatpush.msra.mxu0 0.0
        %811 = vmatpush.msra.mxu0 0.0
        %812 = vmatpush.msra.mxu0 0.0
        %813 = vmatpush.msra.mxu0 0.0
        %814 = vmatpush.msra.mxu0 0.0
        %815 = vmatpush.msra.mxu0 %v716
        %816 = vmatpush.msra.mxu0 %v715
        %817 = vmatpush.msra.mxu0 %v714
        %818 = vmatpush.msra.mxu0 %v713
        %819 = vmatpush.msra.mxu0 %v712
        %820 = vmatpush.msra.mxu0 %v711
        %821 = vmatpush.msra.mxu0 %v710
        %822 = vmatpush.msra.mxu0 %v709
        %823 = vmatmul.f32.gmra.mxu0 %v725
        %v824 = vpop.f32.mrf.mxu0
        %v825 = vadd.f32 %v805, %v824
        %826 = vdwg.mxu0
        %827 = vst [vmem:[%s231] sm:$0xff] %v825
        %p828 = scmp.lt.s32.totalorder %s14, 1
        %s829 = scalar_select %p828, %s14, 1
        %s830 = smul.addr %s829, 8
        %s831 = scalar_lea.vmem %s3, %s830
        // Predicated region
        $region71: #{decoder_forward.1} parent=65 // pred_check
          %p832 = pneg %p100
        $region72: #{decoder_forward.1} parent=65 // pred_check_branch
          %834 = sbr.rel (%p832) target = $region74
        $region73: #{decoder_forward.1} parent=65 // pred_region
          _
        $region74: #{decoder_forward.1} parent=65 // pred_fallthru
          _
      $region66: #{decoder_forward.1} parent=5 // pred_fallthru
        _
      %p835 = scmp.le.s32.totalorder 2, %s9
      // Predicated region
      $region75: #{decoder_forward.1} parent=5 // pred_check
        %p836 = pneg %p835
      $region76: #{decoder_forward.1} parent=5 // pred_check_branch
        %838 = sbr.rel (%p836) target = $region78
      $region77: #{decoder_forward.1} parent=5 // pred_region
        %s839 = ssub.s32 %s9, 2
        // Predicated region
        $region79: #{decoder_forward.1} parent=77 // pred_check
          %p840 = pneg %p106
        $region80: #{decoder_forward.1} parent=77 // pred_check_branch
          %842 = sbr.rel (%p840) target = $region82
        $region81: #{decoder_forward.1} parent=77 // pred_region
          %p843 = scmp.lt.s32.totalorder %s15, 1
          %s844 = scalar_select %p843, %s15, 1
          %s845 = smul.addr %s844, 8
          %s846 = scalar_lea.vmem %s3, %s845
        $region82: #{decoder_forward.1} parent=77 // pred_fallthru
          _
      $region78: #{decoder_forward.1} parent=5 // pred_fallthru
        _
    $region6: #{decoder_forward.1} parent=1 // loop_footer
      %s13 = sadd.s32 1, %s9
    $region7: #{decoder_forward.1} parent=1 // loop_footer_branch
      %8 = sbr.rel target = $region3
    $region8: #{decoder_forward.1} parent=1 // loop_exit
      _

</llo_original>
